<compile_context>
chip_gen: v6e
topology: v6e:2x2x1
jax: 0.10.0
libtpu: 0.0.40
codegen_flags: <defaults>
</compile_context>

<pallas_src>
import jax
import jax.numpy as jnp
from jax.experimental import pallas as pl
from jax.experimental.pallas import tpu as pltpu


def _mlp_kernel(x_ref,
                w1_ref, b1_ref,
                w2_ref, b2_ref,
                w3_ref, b3_ref,
                w4t_ref, b4_ref,
                o_ref):
    # x_ref: (1, TN) lane-dense batch tile.  Weights are PyTorch-layout
    # (out_features, in_features) so each layer is y = W @ h; biases are
    # (out_features, 1) column vectors that broadcast along lanes.
    x = x_ref[...]                                               # (1, TN)

    # Layer 1: in_features == 1 -> pure VPU broadcast multiply (no MXU pass).
    h = jnp.tanh(w1_ref[...] * x + b1_ref[...])                  # (H, TN)

    # Layers 2/3: real MXU matmuls, f32 accumulation.
    h = jnp.tanh(
        jnp.dot(w2_ref[...], h, preferred_element_type=jnp.float32)
        + b2_ref[...])                                           # (10H, TN)
    h = jnp.tanh(
        jnp.dot(w3_ref[...], h, preferred_element_type=jnp.float32)
        + b3_ref[...])                                           # (H, TN)

    # Layer 4: out_features == 1 -> multiply + sublane reduce (XLU), no MXU.
    o_ref[...] = (jnp.sum(w4t_ref[...] * h, axis=0, keepdims=True)
                  + b4_ref[...])                                 # (1, TN)


def regression_net_forward(x, params, *, batch_tile=512):
    """Fused RegressionNet forward pass.

    x      : (N, 1) or (N,) float32
    params : dict with PyTorch-layout weights:
               w1 (H,1)  b1 (H,1)   w2 (10H,H) b2 (10H,1)
               w3 (H,10H) b3 (H,1)  w4 (1,H)   b4 (1,1)
    returns: (N, 1) float32
    """
    x = jnp.asarray(x, jnp.float32).reshape(-1)
    n = x.shape[0]

    # Lane-dense layout: batch on the lane (last) axis, padded to a multiple
    # of the lane tile.  Padded lanes compute garbage and are sliced off.
    lane = 128
    n_pad = ((n + lane - 1) // lane) * lane
    tn = min(batch_tile, n_pad)
    n_pad = ((n_pad + tn - 1) // tn) * tn
    xt = jnp.zeros((1, n_pad), jnp.float32).at[0, :n].set(x)

    w4t = params["w4"].T                                         # (H, 1)
    args = (xt,
            params["w1"], params["b1"],
            params["w2"], params["b2"],
            params["w3"], params["b3"],
            w4t, params["b4"])

    # Batch-tiled x/out; weights/biases are full-array blocks with a constant
    # index_map so they stay VMEM-resident (no re-DMA) across grid steps.
    batch_spec = pl.BlockSpec((1, tn), lambda i: (0, i))
    resident = lambda a: pl.BlockSpec(a.shape, lambda i: (0, 0))

    out_pad = pl.pallas_call(
        _mlp_kernel,
        out_shape=jax.ShapeDtypeStruct((1, n_pad), jnp.float32),
        grid=(n_pad // tn,),
        in_specs=[batch_spec] + [resident(a) for a in args[1:]],
        out_specs=batch_spec,
        compiler_params=pltpu.CompilerParams(
            dimension_semantics=("parallel",),
        ),
    )(*args)

    return out_pad[0, :n].reshape(n, 1)


def init_params(key, n_hidden):
    """Deterministic init matching PyTorch Linear shapes/distribution.

    Weights are (out_features, in_features), biases (out_features, 1),
    both U(-1/sqrt(fan_in), 1/sqrt(fan_in)).
    """
    def linear(key, fan_in, fan_out):
        kw, kb = jax.random.split(key)
        bound = 1.0 / jnp.sqrt(jnp.float32(fan_in))
        w = jax.random.uniform(kw, (fan_out, fan_in), jnp.float32, -bound, bound)
        b = jax.random.uniform(kb, (fan_out, 1), jnp.float32, -bound, bound)
        return w, b

    k1, k2, k3, k4 = jax.random.split(key, 4)
    w1, b1 = linear(k1, 1, n_hidden)                     # __input_layer
    w2, b2 = linear(k2, n_hidden, n_hidden * 10)         # __sub_layer_fc1
    w3, b3 = linear(k3, n_hidden * 10, n_hidden)         # __sub_layer_fc2
    w4, b4 = linear(k4, n_hidden, 1)                     # __output_layer
    return dict(w1=w1, b1=b1, w2=w2, b2=b2, w3=w3, b3=b3, w4=w4, b4=b4)


def reference_forward(x, p):
    # Plain-JAX reference using the same PyTorch-layout params.
    h = jnp.tanh(x @ p["w1"].T + p["b1"].T)
    h = jnp.tanh(h @ p["w2"].T + p["b2"].T)
    h = jnp.tanh(h @ p["w3"].T + p["b3"].T)
    return h @ p["w4"].T + p["b4"].T


if __name__ == "__main__":
    key = jax.random.PRNGKey(0)
    k_params, k_x = jax.random.split(key)

    n_hidden = 32          # n_hidden_neurons
    batch = 8              # small demo batch (wrapper pads lanes internally)

    params = init_params(k_params, n_hidden)
    x = jax.random.normal(k_x, (batch, 1), jnp.float32)

    y = regression_net_forward(x, params)
    y = jax.block_until_ready(y)

    y_ref = reference_forward(x, params)
    assert y.shape == (batch, 1)
    assert jnp.allclose(y, y_ref, atol=1e-5, rtol=1e-4)

    # TODO(synk): training loops (optimize_mse / optimize_mae with Adam) are
    # host-side PyTorch optimizer code, not part of the forward kernel.
    print("KERNEL_OK")
</pallas_src>

<mosaic_0001>
module attributes {stable_mosaic.version = 11 : i64} {
  func.func @_mlp_kernel(%arg0: i32, %arg1: memref<1x128xf32, #tpu.memory_space<vmem>>, %arg2: memref<32x1xf32, #tpu.memory_space<vmem>>, %arg3: memref<32x1xf32, #tpu.memory_space<vmem>>, %arg4: memref<320x32xf32, #tpu.memory_space<vmem>>, %arg5: memref<320x1xf32, #tpu.memory_space<vmem>>, %arg6: memref<32x320xf32, #tpu.memory_space<vmem>>, %arg7: memref<32x1xf32, #tpu.memory_space<vmem>>, %arg8: memref<32x1xf32, #tpu.memory_space<vmem>>, %arg9: memref<1x1xf32, #tpu.memory_space<vmem>>, %arg10: memref<1x128xf32, #tpu.memory_space<vmem>>) attributes {dimension_semantics = [#tpu.dimension_semantics<parallel>], iteration_bounds = array<i64: 1>, scalar_prefetch = 0 : i64, scratch_operands = 0 : i64, tpu.core_type = #tpu.core_type<tc>, window_params = [{transform_indices = @transform_0, window_bounds = array<i64: 1, 128>}, {pipeline_mode = #tpu.pipeline_mode<synchronous>, transform_indices = @transform_1, window_bounds = array<i64: 32, 1>}, {pipeline_mode = #tpu.pipeline_mode<synchronous>, transform_indices = @transform_2, window_bounds = array<i64: 32, 1>}, {pipeline_mode = #tpu.pipeline_mode<synchronous>, transform_indices = @transform_3, window_bounds = array<i64: 320, 32>}, {pipeline_mode = #tpu.pipeline_mode<synchronous>, transform_indices = @transform_4, window_bounds = array<i64: 320, 1>}, {pipeline_mode = #tpu.pipeline_mode<synchronous>, transform_indices = @transform_5, window_bounds = array<i64: 32, 320>}, {pipeline_mode = #tpu.pipeline_mode<synchronous>, transform_indices = @transform_6, window_bounds = array<i64: 32, 1>}, {pipeline_mode = #tpu.pipeline_mode<synchronous>, transform_indices = @transform_7, window_bounds = array<i64: 32, 1>}, {pipeline_mode = #tpu.pipeline_mode<synchronous>, transform_indices = @transform_8, window_bounds = array<i64: 1, 1>}, {transform_indices = @transform_9, window_bounds = array<i64: 1, 128>}]} {
    %c0 = arith.constant 0 : index
    %c0_0 = arith.constant 0 : index
    %0 = vector.load %arg1[%c0, %c0_0] : memref<1x128xf32, #tpu.memory_space<vmem>>, vector<1x128xf32>
    %c0_1 = arith.constant 0 : index
    %c0_2 = arith.constant 0 : index
    %1 = vector.load %arg2[%c0_1, %c0_2] : memref<32x1xf32, #tpu.memory_space<vmem>>, vector<32x1xf32>
    %2 = vector.broadcast %1 : vector<32x1xf32> to vector<32x128xf32>
    %3 = vector.broadcast %0 : vector<1x128xf32> to vector<32x128xf32>
    %4 = arith.mulf %2, %3 : vector<32x128xf32>
    %c0_3 = arith.constant 0 : index
    %c0_4 = arith.constant 0 : index
    %5 = vector.load %arg3[%c0_3, %c0_4] : memref<32x1xf32, #tpu.memory_space<vmem>>, vector<32x1xf32>
    %6 = vector.broadcast %5 : vector<32x1xf32> to vector<32x128xf32>
    %7 = arith.addf %4, %6 : vector<32x128xf32>
    %8 = math.tanh %7 : vector<32x128xf32>
    %c0_5 = arith.constant 0 : index
    %c0_6 = arith.constant 0 : index
    %9 = vector.load %arg4[%c0_5, %c0_6] : memref<320x32xf32, #tpu.memory_space<vmem>>, vector<320x32xf32>
    %cst = arith.constant dense<0.000000e+00> : vector<320x128xf32>
    %10 = tpu.matmul %9, %8, %cst {dimension_numbers = #tpu.dot_dimension_numbers<[1], [0], [0], [1], [0, 0, 1, 1], [], []>} : vector<320x32xf32>, vector<32x128xf32>, vector<320x128xf32> -> vector<320x128xf32>
    %c0_7 = arith.constant 0 : index
    %c0_8 = arith.constant 0 : index
    %11 = vector.load %arg5[%c0_7, %c0_8] : memref<320x1xf32, #tpu.memory_space<vmem>>, vector<320x1xf32>
    %12 = vector.broadcast %11 : vector<320x1xf32> to vector<320x128xf32>
    %13 = arith.addf %10, %12 : vector<320x128xf32>
    %14 = math.tanh %13 : vector<320x128xf32>
    %c0_9 = arith.constant 0 : index
    %c0_10 = arith.constant 0 : index
    %15 = vector.load %arg6[%c0_9, %c0_10] : memref<32x320xf32, #tpu.memory_space<vmem>>, vector<32x320xf32>
    %cst_11 = arith.constant dense<0.000000e+00> : vector<32x128xf32>
    %16 = tpu.matmul %15, %14, %cst_11 {dimension_numbers = #tpu.dot_dimension_numbers<[1], [0], [0], [1], [0, 0, 1, 1], [], []>} : vector<32x320xf32>, vector<320x128xf32>, vector<32x128xf32> -> vector<32x128xf32>
    %c0_12 = arith.constant 0 : index
    %c0_13 = arith.constant 0 : index
    %17 = vector.load %arg7[%c0_12, %c0_13] : memref<32x1xf32, #tpu.memory_space<vmem>>, vector<32x1xf32>
    %18 = vector.broadcast %17 : vector<32x1xf32> to vector<32x128xf32>
    %19 = arith.addf %16, %18 : vector<32x128xf32>
    %20 = math.tanh %19 : vector<32x128xf32>
    %c0_14 = arith.constant 0 : index
    %c0_15 = arith.constant 0 : index
    %21 = vector.load %arg8[%c0_14, %c0_15] : memref<32x1xf32, #tpu.memory_space<vmem>>, vector<32x1xf32>
    %22 = vector.broadcast %21 : vector<32x1xf32> to vector<32x128xf32>
    %23 = arith.mulf %22, %20 : vector<32x128xf32>
    %cst_16 = arith.constant dense<0.000000e+00> : vector<128xf32>
    %24 = vector.multi_reduction <add>, %23, %cst_16 [0] : vector<32x128xf32> to vector<128xf32>
    %25 = vector.shape_cast %24 : vector<128xf32> to vector<1x128xf32>
    %c0_17 = arith.constant 0 : index
    %c0_18 = arith.constant 0 : index
    %26 = vector.load %arg9[%c0_17, %c0_18] : memref<1x1xf32, #tpu.memory_space<vmem>>, vector<1x1xf32>
    %27 = vector.broadcast %26 : vector<1x1xf32> to vector<1x128xf32>
    %28 = arith.addf %25, %27 : vector<1x128xf32>
    %c0_19 = arith.constant 0 : index
    %c0_20 = arith.constant 0 : index
    %29 = vector.load %arg10[%c0_19, %c0_20] : memref<1x128xf32, #tpu.memory_space<vmem>>, vector<1x128xf32>
    tpu.vector_store %arg10[%c0_19, %c0_20], %28 {strides = array<i32>} : memref<1x128xf32, #tpu.memory_space<vmem>>, vector<1x128xf32>,
    return
  }
  func.func @transform_0(%arg0: i32) -> (i32, i32) {
    %c0_i32 = arith.constant 0 : i32
    %c0_i32_0 = arith.constant 0 : i32
    return %c0_i32, %arg0 : i32, i32
  }
  func.func @transform_1(%arg0: i32) -> (i32, i32) {
    %c0_i32 = arith.constant 0 : i32
    %c0_i32_0 = arith.constant 0 : i32
    %c0_i32_1 = arith.constant 0 : i32
    return %c0_i32, %c0_i32_0 : i32, i32
  }
  func.func @transform_2(%arg0: i32) -> (i32, i32) {
    %c0_i32 = arith.constant 0 : i32
    %c0_i32_0 = arith.constant 0 : i32
    %c0_i32_1 = arith.constant 0 : i32
    return %c0_i32, %c0_i32_0 : i32, i32
  }
  func.func @transform_3(%arg0: i32) -> (i32, i32) {
    %c0_i32 = arith.constant 0 : i32
    %c0_i32_0 = arith.constant 0 : i32
    %c0_i32_1 = arith.constant 0 : i32
    return %c0_i32, %c0_i32_0 : i32, i32
  }
  func.func @transform_4(%arg0: i32) -> (i32, i32) {
    %c0_i32 = arith.constant 0 : i32
    %c0_i32_0 = arith.constant 0 : i32
    %c0_i32_1 = arith.constant 0 : i32
    return %c0_i32, %c0_i32_0 : i32, i32
  }
  func.func @transform_5(%arg0: i32) -> (i32, i32) {
    %c0_i32 = arith.constant 0 : i32
    %c0_i32_0 = arith.constant 0 : i32
    %c0_i32_1 = arith.constant 0 : i32
    return %c0_i32, %c0_i32_0 : i32, i32
  }
  func.func @transform_6(%arg0: i32) -> (i32, i32) {
    %c0_i32 = arith.constant 0 : i32
    %c0_i32_0 = arith.constant 0 : i32
    %c0_i32_1 = arith.constant 0 : i32
    return %c0_i32, %c0_i32_0 : i32, i32
  }
  func.func @transform_7(%arg0: i32) -> (i32, i32) {
    %c0_i32 = arith.constant 0 : i32
    %c0_i32_0 = arith.constant 0 : i32
    %c0_i32_1 = arith.constant 0 : i32
    return %c0_i32, %c0_i32_0 : i32, i32
  }
  func.func @transform_8(%arg0: i32) -> (i32, i32) {
    %c0_i32 = arith.constant 0 : i32
    %c0_i32_0 = arith.constant 0 : i32
    %c0_i32_1 = arith.constant 0 : i32
    return %c0_i32, %c0_i32_0 : i32, i32
  }
  func.func @transform_9(%arg0: i32) -> (i32, i32) {
    %c0_i32 = arith.constant 0 : i32
    %c0_i32_0 = arith.constant 0 : i32
    return %c0_i32, %arg0 : i32, i32
  }
}

</mosaic_0001>

<llo_original>
// kernel: tpu_custom_call.1
$region0: #{tpu_custom_call.1}
  #allocation0 [shape = 'u32[]', space=smem, size = 0x4, offset = 0x4, fixed_abs, tag = 'smem constant byte address 0x4 - core index']
  #allocation1 [shape = 'u32[144,128]{1,0:T(1,128)}', space=vmem, size = 0x12000, scoped, tag = 'internal scratch']
  #allocation2 [shape = 'f32[1,1]{1,0:T(1,128)S(1)}', space=vmem, size = 0x200, scoped, tag = 'scoped memory for tpu_custom_call.1']
  %s0 = inlined_call_operand.vmem [shape: f32[1,128], index: 0, kind: input, shape index: {}]
  %s1 = inlined_call_operand.vmem [shape: f32[32,1], index: 1, kind: input, shape index: {}]
  %s2 = inlined_call_operand.vmem [shape: f32[32,1], index: 2, kind: input, shape index: {}]
  %s3 = inlined_call_operand.vmem [shape: f32[320,32], index: 3, kind: input, shape index: {}]
  %s4 = inlined_call_operand.vmem [shape: f32[320,1], index: 4, kind: input, shape index: {}]
  %s5 = inlined_call_operand.vmem [shape: f32[32,320], index: 5, kind: input, shape index: {}]
  %s6 = inlined_call_operand.vmem [shape: f32[32,1], index: 6, kind: input, shape index: {}]
  %s7 = inlined_call_operand.vmem [shape: f32[32,1], index: 7, kind: input, shape index: {}]
  %s8 = inlined_call_operand.<no memory space> [shape: f32[1,1], index: 8, kind: input, shape index: {}]
  %s9 = inlined_call_operand.hbm [shape: f32[1,128], index: 9, kind: output, shape index: {}]
  %s10 = sld [smem:[#allocation0]]
  $region46: #{tpu_custom_call.1} parent=0
    _
  %s12 = ssub.s32 1, %s10
  %s13 = scalar_select 0, %s12, %s10
  %v14 = vstv %s8
  %15 = vst [vmem:[#allocation2] sm:$0x1] %v14
  $region1: #{tpu_custom_call.1} parent=0
    #allocation3 [shape = 'u8[512]{0}', space=vmem, size = 0x400, scoped, tag = 'output window, operand 0, single buffered']
    #allocation4 [shape = 's32[1]{0}', space=sflag, size = 0x4, scoped, tag = 'scoped memory for tpu_custom_call.1']
    %16 = vsyncpa [#allocation4], 0
    // Predicated region
    $region2: #{tpu_custom_call.1} parent=1 // pred_check
      _
    $region3: #{tpu_custom_call.1} parent=1 // pred_check_branch
      %18 = sbr.rel (0) target = $region5
    $region4: #{tpu_custom_call.1} parent=1 // pred_region
      _
    $region5: #{tpu_custom_call.1} parent=1 // pred_fallthru
      _
    // Predicated region
    $region6: #{tpu_custom_call.1} parent=1 // pred_check
      _
    $region7: #{tpu_custom_call.1} parent=1 // pred_check_branch
      %20 = sbr.rel (0) target = $region9
    $region8: #{tpu_custom_call.1} parent=1 // pred_region
      _
    $region9: #{tpu_custom_call.1} parent=1 // pred_fallthru
      _
    // Predicated region
    $region10: #{tpu_custom_call.1} parent=1 // pred_check
      _
    $region11: #{tpu_custom_call.1} parent=1 // pred_check_branch
      %22 = sbr.rel (0) target = $region13
    $region12: #{tpu_custom_call.1} parent=1 // pred_region
      _
    $region13: #{tpu_custom_call.1} parent=1 // pred_fallthru
      _
    // Predicated region
    $region14: #{tpu_custom_call.1} parent=1 // pred_check
      _
    $region15: #{tpu_custom_call.1} parent=1 // pred_check_branch
      %24 = sbr.rel (0) target = $region17
    $region16: #{tpu_custom_call.1} parent=1 // pred_region
      _
    $region17: #{tpu_custom_call.1} parent=1 // pred_fallthru
      _
    // Predicated region
    $region18: #{tpu_custom_call.1} parent=1 // pred_check
      _
    $region19: #{tpu_custom_call.1} parent=1 // pred_check_branch
      %26 = sbr.rel (0) target = $region21
    $region20: #{tpu_custom_call.1} parent=1 // pred_region
      _
    $region21: #{tpu_custom_call.1} parent=1 // pred_fallthru
      _
    // Predicated region
    $region22: #{tpu_custom_call.1} parent=1 // pred_check
      _
    $region23: #{tpu_custom_call.1} parent=1 // pred_check_branch
      %28 = sbr.rel (0) target = $region25
    $region24: #{tpu_custom_call.1} parent=1 // pred_region
      _
    $region25: #{tpu_custom_call.1} parent=1 // pred_fallthru
      _
    // Predicated region
    $region26: #{tpu_custom_call.1} parent=1 // pred_check
      _
    $region27: #{tpu_custom_call.1} parent=1 // pred_check_branch
      %30 = sbr.rel (0) target = $region29
    $region28: #{tpu_custom_call.1} parent=1 // pred_region
      _
    $region29: #{tpu_custom_call.1} parent=1 // pred_fallthru
      _
    // Predicated region
    $region30: #{tpu_custom_call.1} parent=1 // pred_check
      _
    $region31: #{tpu_custom_call.1} parent=1 // pred_check_branch
      %32 = sbr.rel (0) target = $region33
    $region32: #{tpu_custom_call.1} parent=1 // pred_region
      _
    $region33: #{tpu_custom_call.1} parent=1 // pred_fallthru
      _
    // Predicated region
    $region34: #{tpu_custom_call.1} parent=1 // pred_check
      _
    $region35: #{tpu_custom_call.1} parent=1 // pred_check_branch
      %34 = sbr.rel (0) target = $region37
    $region36: #{tpu_custom_call.1} parent=1 // pred_region
      _
    $region37: #{tpu_custom_call.1} parent=1 // pred_fallthru
      _
    %v35 = vld [vmem:[%s0] sm:$0x1]
    %v36 = vld [vmem:[%s1] sm:$0xff]
    %v37 = vld [vmem:[%s1 + $0x8] sm:$0xff]
    %v38 = vld [vmem:[%s1 + $0x10] sm:$0xff]
    %v39 = vld [vmem:[%s1 + $0x18] sm:$0xff]
    %41 = vset.pattern.permute.xlu0 0
    %42 = vperm.xlu0 %41, %v36
    %v43 = vpop.permute.xlu0 %42
    %46 = vset.pattern.permute.xlu0 0
    %47 = vperm.xlu0 %46, %v37
    %v48 = vpop.permute.xlu0 %47
    %51 = vset.pattern.permute.xlu0 0
    %52 = vperm.xlu0 %51, %v38
    %v53 = vpop.permute.xlu0 %52
    %56 = vset.pattern.permute.xlu0 0
    %57 = vperm.xlu0 %56, %v39
    %v58 = vpop.permute.xlu0 %57
    %v61 = vlaneseq
    %v62 = vshrl.u32 %v61, 7
    %v63 = vsub.s32 0, %v62
    %v64 = vrot.slane %v35, %v63
    %v66 = vmul.f32 %v43, %v64
    %v67 = vmul.f32 %v48, %v64
    %v68 = vmul.f32 %v53, %v64
    %v69 = vmul.f32 %v58, %v64
    %v70 = vld [vmem:[%s2] sm:$0xff]
    %v71 = vld [vmem:[%s2 + $0x8] sm:$0xff]
    %v72 = vld [vmem:[%s2 + $0x10] sm:$0xff]
    %v73 = vld [vmem:[%s2 + $0x18] sm:$0xff]
    %75 = vset.pattern.permute.xlu0 0
    %76 = vperm.xlu0 %75, %v70
    %v77 = vpop.permute.xlu0 %76
    %80 = vset.pattern.permute.xlu0 0
    %81 = vperm.xlu0 %80, %v71
    %v82 = vpop.permute.xlu0 %81
    %85 = vset.pattern.permute.xlu0 0
    %86 = vperm.xlu0 %85, %v72
    %v87 = vpop.permute.xlu0 %86
    %90 = vset.pattern.permute.xlu0 0
    %91 = vperm.xlu0 %90, %v73
    %v92 = vpop.permute.xlu0 %91
    %v94 = vadd.f32 %v66, %v77
    %v95 = vadd.f32 %v67, %v82
    %v96 = vadd.f32 %v68, %v87
    %v97 = vadd.f32 %v69, %v92
    %v98 = vtanh.pop %v94
    %v99 = vtanh.pop %v95
    %v100 = vtanh.pop %v96
    %v101 = vtanh.pop %v97
    %v102 = vld [vmem:[%s3] sm:$0xff]
    %v103 = vld [vmem:[%s3 + $0x8] sm:$0xff]
    %v104 = vld [vmem:[%s3 + $0x10] sm:$0xff]
    %v105 = vld [vmem:[%s3 + $0x18] sm:$0xff]
    %v106 = vld [vmem:[%s3 + $0x20] sm:$0xff]
    %v107 = vld [vmem:[%s3 + $0x28] sm:$0xff]
    %v108 = vld [vmem:[%s3 + $0x30] sm:$0xff]
    %v109 = vld [vmem:[%s3 + $0x38] sm:$0xff]
    %v110 = vld [vmem:[%s3 + $0x40] sm:$0xff]
    %v111 = vld [vmem:[%s3 + $0x48] sm:$0xff]
    %v112 = vld [vmem:[%s3 + $0x50] sm:$0xff]
    %v113 = vld [vmem:[%s3 + $0x58] sm:$0xff]
    %v114 = vld [vmem:[%s3 + $0x60] sm:$0xff]
    %v115 = vld [vmem:[%s3 + $0x68] sm:$0xff]
    %v116 = vld [vmem:[%s3 + $0x70] sm:$0xff]
    %v117 = vld [vmem:[%s3 + $0x78] sm:$0xff]
    %v118 = vld [vmem:[%s3 + $0x80] sm:$0xff]
    %v119 = vld [vmem:[%s3 + $0x88] sm:$0xff]
    %v120 = vld [vmem:[%s3 + $0x90] sm:$0xff]
    %v121 = vld [vmem:[%s3 + $0x98] sm:$0xff]
    %v122 = vld [vmem:[%s3 + $0xa0] sm:$0xff]
    %v123 = vld [vmem:[%s3 + $0xa8] sm:$0xff]
    %v124 = vld [vmem:[%s3 + $0xb0] sm:$0xff]
    %v125 = vld [vmem:[%s3 + $0xb8] sm:$0xff]
    %v126 = vld [vmem:[%s3 + $0xc0] sm:$0xff]
    %v127 = vld [vmem:[%s3 + $0xc8] sm:$0xff]
    %v128 = vld [vmem:[%s3 + $0xd0] sm:$0xff]
    %v129 = vld [vmem:[%s3 + $0xd8] sm:$0xff]
    %v130 = vld [vmem:[%s3 + $0xe0] sm:$0xff]
    %v131 = vld [vmem:[%s3 + $0xe8] sm:$0xff]
    %v132 = vld [vmem:[%s3 + $0xf0] sm:$0xff]
    %v133 = vld [vmem:[%s3 + $0xf8] sm:$0xff]
    %v134 = vld [vmem:[%s3 + $0x100] sm:$0xff]
    %v135 = vld [vmem:[%s3 + $0x108] sm:$0xff]
    %v136 = vld [vmem:[%s3 + $0x110] sm:$0xff]
    %v137 = vld [vmem:[%s3 + $0x118] sm:$0xff]
    %v138 = vld [vmem:[%s3 + $0x120] sm:$0xff]
    %v139 = vld [vmem:[%s3 + $0x128] sm:$0xff]
    %v140 = vld [vmem:[%s3 + $0x130] sm:$0xff]
    %v141 = vld [vmem:[%s3 + $0x138] sm:$0xff]
    %v142 = vld [vmem:[%s4] sm:$0xff]
    %v143 = vld [vmem:[%s4 + $0x8] sm:$0xff]
    %v144 = vld [vmem:[%s4 + $0x10] sm:$0xff]
    %v145 = vld [vmem:[%s4 + $0x18] sm:$0xff]
    %v146 = vld [vmem:[%s4 + $0x20] sm:$0xff]
    %v147 = vld [vmem:[%s4 + $0x28] sm:$0xff]
    %v148 = vld [vmem:[%s4 + $0x30] sm:$0xff]
    %v149 = vld [vmem:[%s4 + $0x38] sm:$0xff]
    %v150 = vld [vmem:[%s4 + $0x40] sm:$0xff]
    %v151 = vld [vmem:[%s4 + $0x48] sm:$0xff]
    %v152 = vld [vmem:[%s4 + $0x50] sm:$0xff]
    %v153 = vld [vmem:[%s4 + $0x58] sm:$0xff]
    %v154 = vld [vmem:[%s4 + $0x60] sm:$0xff]
    %v155 = vld [vmem:[%s4 + $0x68] sm:$0xff]
    %v156 = vld [vmem:[%s4 + $0x70] sm:$0xff]
    %v157 = vld [vmem:[%s4 + $0x78] sm:$0xff]
    %v158 = vld [vmem:[%s4 + $0x80] sm:$0xff]
    %v159 = vld [vmem:[%s4 + $0x88] sm:$0xff]
    %v160 = vld [vmem:[%s4 + $0x90] sm:$0xff]
    %v161 = vld [vmem:[%s4 + $0x98] sm:$0xff]
    %v162 = vld [vmem:[%s4 + $0xa0] sm:$0xff]
    %v163 = vld [vmem:[%s4 + $0xa8] sm:$0xff]
    %v164 = vld [vmem:[%s4 + $0xb0] sm:$0xff]
    %v165 = vld [vmem:[%s4 + $0xb8] sm:$0xff]
    %v166 = vld [vmem:[%s4 + $0xc0] sm:$0xff]
    %v167 = vld [vmem:[%s4 + $0xc8] sm:$0xff]
    %v168 = vld [vmem:[%s4 + $0xd0] sm:$0xff]
    %v169 = vld [vmem:[%s4 + $0xd8] sm:$0xff]
    %v170 = vld [vmem:[%s4 + $0xe0] sm:$0xff]
    %v171 = vld [vmem:[%s4 + $0xe8] sm:$0xff]
    %v172 = vld [vmem:[%s4 + $0xf0] sm:$0xff]
    %v173 = vld [vmem:[%s4 + $0xf8] sm:$0xff]
    %v174 = vld [vmem:[%s4 + $0x100] sm:$0xff]
    %v175 = vld [vmem:[%s4 + $0x108] sm:$0xff]
    %v176 = vld [vmem:[%s4 + $0x110] sm:$0xff]
    %v177 = vld [vmem:[%s4 + $0x118] sm:$0xff]
    %v178 = vld [vmem:[%s4 + $0x120] sm:$0xff]
    %v179 = vld [vmem:[%s4 + $0x128] sm:$0xff]
    %v180 = vld [vmem:[%s4 + $0x130] sm:$0xff]
    %v181 = vld [vmem:[%s4 + $0x138] sm:$0xff]
    %183 = vset.pattern.permute.xlu0 0
    %184 = vperm.xlu0 %183, %v142
    %v185 = vpop.permute.xlu0 %184
    %188 = vset.pattern.permute.xlu0 0
    %189 = vperm.xlu0 %188, %v143
    %v190 = vpop.permute.xlu0 %189
    %193 = vset.pattern.permute.xlu0 0
    %194 = vperm.xlu0 %193, %v144
    %v195 = vpop.permute.xlu0 %194
    %198 = vset.pattern.permute.xlu0 0
    %199 = vperm.xlu0 %198, %v145
    %v200 = vpop.permute.xlu0 %199
    %203 = vset.pattern.permute.xlu0 0
    %204 = vperm.xlu0 %203, %v146
    %v205 = vpop.permute.xlu0 %204
    %208 = vset.pattern.permute.xlu0 0
    %209 = vperm.xlu0 %208, %v147
    %v210 = vpop.permute.xlu0 %209
    %213 = vset.pattern.permute.xlu0 0
    %214 = vperm.xlu0 %213, %v148
    %v215 = vpop.permute.xlu0 %214
    %218 = vset.pattern.permute.xlu0 0
    %219 = vperm.xlu0 %218, %v149
    %v220 = vpop.permute.xlu0 %219
    %223 = vset.pattern.permute.xlu0 0
    %224 = vperm.xlu0 %223, %v150
    %v225 = vpop.permute.xlu0 %224
    %228 = vset.pattern.permute.xlu0 0
    %229 = vperm.xlu0 %228, %v151
    %v230 = vpop.permute.xlu0 %229
    %233 = vset.pattern.permute.xlu0 0
    %234 = vperm.xlu0 %233, %v152
    %v235 = vpop.permute.xlu0 %234
    %238 = vset.pattern.permute.xlu0 0
    %239 = vperm.xlu0 %238, %v153
    %v240 = vpop.permute.xlu0 %239
    %243 = vset.pattern.permute.xlu0 0
    %244 = vperm.xlu0 %243, %v154
    %v245 = vpop.permute.xlu0 %244
    %248 = vset.pattern.permute.xlu0 0
    %249 = vperm.xlu0 %248, %v155
    %v250 = vpop.permute.xlu0 %249
    %253 = vset.pattern.permute.xlu0 0
    %254 = vperm.xlu0 %253, %v156
    %v255 = vpop.permute.xlu0 %254
    %258 = vset.pattern.permute.xlu0 0
    %259 = vperm.xlu0 %258, %v157
    %v260 = vpop.permute.xlu0 %259
    %263 = vset.pattern.permute.xlu0 0
    %264 = vperm.xlu0 %263, %v158
    %v265 = vpop.permute.xlu0 %264
    %268 = vset.pattern.permute.xlu0 0
    %269 = vperm.xlu0 %268, %v159
    %v270 = vpop.permute.xlu0 %269
    %273 = vset.pattern.permute.xlu0 0
    %274 = vperm.xlu0 %273, %v160
    %v275 = vpop.permute.xlu0 %274
    %278 = vset.pattern.permute.xlu0 0
    %279 = vperm.xlu0 %278, %v161
    %v280 = vpop.permute.xlu0 %279
    %283 = vset.pattern.permute.xlu0 0
    %284 = vperm.xlu0 %283, %v162
    %v285 = vpop.permute.xlu0 %284
    %288 = vset.pattern.permute.xlu0 0
    %289 = vperm.xlu0 %288, %v163
    %v290 = vpop.permute.xlu0 %289
    %293 = vset.pattern.permute.xlu0 0
    %294 = vperm.xlu0 %293, %v164
    %v295 = vpop.permute.xlu0 %294
    %298 = vset.pattern.permute.xlu0 0
    %299 = vperm.xlu0 %298, %v165
    %v300 = vpop.permute.xlu0 %299
    %303 = vset.pattern.permute.xlu0 0
    %304 = vperm.xlu0 %303, %v166
    %v305 = vpop.permute.xlu0 %304
    %308 = vset.pattern.permute.xlu0 0
    %309 = vperm.xlu0 %308, %v167
    %v310 = vpop.permute.xlu0 %309
    %313 = vset.pattern.permute.xlu0 0
    %314 = vperm.xlu0 %313, %v168
    %v315 = vpop.permute.xlu0 %314
    %318 = vset.pattern.permute.xlu0 0
    %319 = vperm.xlu0 %318, %v169
    %v320 = vpop.permute.xlu0 %319
    %323 = vset.pattern.permute.xlu0 0
    %324 = vperm.xlu0 %323, %v170
    %v325 = vpop.permute.xlu0 %324
    %328 = vset.pattern.permute.xlu0 0
    %329 = vperm.xlu0 %328, %v171
    %v330 = vpop.permute.xlu0 %329
    %333 = vset.pattern.permute.xlu0 0
    %334 = vperm.xlu0 %333, %v172
    %v335 = vpop.permute.xlu0 %334
    %338 = vset.pattern.permute.xlu0 0
    %339 = vperm.xlu0 %338, %v173
    %v340 = vpop.permute.xlu0 %339
    %343 = vset.pattern.permute.xlu0 0
    %344 = vperm.xlu0 %343, %v174
    %v345 = vpop.permute.xlu0 %344
    %348 = vset.pattern.permute.xlu0 0
    %349 = vperm.xlu0 %348, %v175
    %v350 = vpop.permute.xlu0 %349
    %353 = vset.pattern.permute.xlu0 0
    %354 = vperm.xlu0 %353, %v176
    %v355 = vpop.permute.xlu0 %354
    %358 = vset.pattern.permute.xlu0 0
    %359 = vperm.xlu0 %358, %v177
    %v360 = vpop.permute.xlu0 %359
    %363 = vset.pattern.permute.xlu0 0
    %364 = vperm.xlu0 %363, %v178
    %v365 = vpop.permute.xlu0 %364
    %368 = vset.pattern.permute.xlu0 0
    %369 = vperm.xlu0 %368, %v179
    %v370 = vpop.permute.xlu0 %369
    %373 = vset.pattern.permute.xlu0 0
    %374 = vperm.xlu0 %373, %v180
    %v375 = vpop.permute.xlu0 %374
    %378 = vset.pattern.permute.xlu0 0
    %379 = vperm.xlu0 %378, %v181
    %v380 = vpop.permute.xlu0 %379
    %vm382 = vcmask 261120
    %v384 = vsel %vm382, %v102, 0
    %v387 = vsel %vm382, %v103, 0
    %v390 = vsel %vm382, %v104, 0
    %v393 = vsel %vm382, %v105, 0
    %v396 = vsel %vm382, %v106, 0
    %v399 = vsel %vm382, %v107, 0
    %v402 = vsel %vm382, %v108, 0
    %v405 = vsel %vm382, %v109, 0
    %v408 = vsel %vm382, %v110, 0
    %v411 = vsel %vm382, %v111, 0
    %v414 = vsel %vm382, %v112, 0
    %v417 = vsel %vm382, %v113, 0
    %v420 = vsel %vm382, %v114, 0
    %v423 = vsel %vm382, %v115, 0
    %v426 = vsel %vm382, %v116, 0
    %v429 = vsel %vm382, %v117, 0
    %v432 = vsel %vm382, %v118, 0
    %v435 = vsel %vm382, %v119, 0
    %v438 = vsel %vm382, %v120, 0
    %v441 = vsel %vm382, %v121, 0
    %v444 = vsel %vm382, %v122, 0
    %v447 = vsel %vm382, %v123, 0
    %v450 = vsel %vm382, %v124, 0
    %v453 = vsel %vm382, %v125, 0
    %v456 = vsel %vm382, %v126, 0
    %v459 = vsel %vm382, %v127, 0
    %v462 = vsel %vm382, %v128, 0
    %v465 = vsel %vm382, %v129, 0
    %v468 = vsel %vm382, %v130, 0
    %v471 = vsel %vm382, %v131, 0
    %v474 = vsel %vm382, %v132, 0
    %v477 = vsel %vm382, %v133, 0
    %v480 = vsel %vm382, %v134, 0
    %v483 = vsel %vm382, %v135, 0
    %v486 = vsel %vm382, %v136, 0
    %v489 = vsel %vm382, %v137, 0
    %v492 = vsel %vm382, %v138, 0
    %v495 = vsel %vm382, %v139, 0
    %v498 = vsel %vm382, %v140, 0
    %v501 = vsel %vm382, %v141, 0
    %503 = vmatprep.subr.mxu0 0.0
    %504 = vmatpush1.msra.mxu0 0.0
    %505 = vmatprep.subr.mxu0 0.0
    %506 = vmatpush1.msra.mxu0 0.0
    %507 = vmatprep.subr.mxu0 0.0
    %508 = vmatpush1.msra.mxu0 0.0
    %509 = vmatprep.subr.mxu0 0.0
    %510 = vmatpush1.msra.mxu0 0.0
    %511 = vmatprep.subr.mxu0 0.0
    %512 = vmatpush1.msra.mxu0 0.0
    %513 = vmatprep.subr.mxu0 0.0
    %514 = vmatpush1.msra.mxu0 0.0
    %515 = vmatprep.subr.mxu0 0.0
    %516 = vmatpush1.msra.mxu0 0.0
    %517 = vmatprep.subr.mxu0 0.0
    %518 = vmatpush1.msra.mxu0 0.0
    %519 = vmatprep.subr.mxu0 0.0
    %520 = vmatpush1.msra.mxu0 0.0
    %521 = vmatprep.subr.mxu0 0.0
    %522 = vmatpush1.msra.mxu0 0.0
    %523 = vmatprep.subr.mxu0 0.0
    %524 = vmatpush1.msra.mxu0 0.0
    %525 = vmatprep.subr.mxu0 0.0
    %526 = vmatpush1.msra.mxu0 0.0
    %527 = vmatprep.subr.mxu0 0.0
    %528 = vmatpush1.msra.mxu0 %v101
    %529 = vmatprep.subr.mxu0 0.0
    %530 = vmatpush1.msra.mxu0 %v100
    %531 = vmatprep.subr.mxu0 0.0
    %532 = vmatpush1.msra.mxu0 %v99
    %533 = vmatprep.subr.mxu0 0.0
    %534 = vmatpush1.msra.mxu0 %v98
    %535 = vmatprep.subr.mxu0 0.0
    %536 = vmatpush2.msra.mxu0 0.0
    %537 = vmatprep.subr.mxu0 0.0
    %538 = vmatpush2.msra.mxu0 0.0
    %539 = vmatprep.subr.mxu0 0.0
    %540 = vmatpush2.msra.mxu0 0.0
    %541 = vmatprep.subr.mxu0 0.0
    %542 = vmatpush2.msra.mxu0 0.0
    %543 = vmatprep.subr.mxu0 0.0
    %544 = vmatpush2.msra.mxu0 0.0
    %545 = vmatprep.subr.mxu0 0.0
    %546 = vmatpush2.msra.mxu0 0.0
    %547 = vmatprep.subr.mxu0 0.0
    %548 = vmatpush2.msra.mxu0 0.0
    %549 = vmatprep.subr.mxu0 0.0
    %550 = vmatpush2.msra.mxu0 0.0
    %551 = vmatprep.subr.mxu0 0.0
    %552 = vmatpush2.msra.mxu0 0.0
    %553 = vmatprep.subr.mxu0 0.0
    %554 = vmatpush2.msra.mxu0 0.0
    %555 = vmatprep.subr.mxu0 0.0
    %556 = vmatpush2.msra.mxu0 0.0
    %557 = vmatprep.subr.mxu0 0.0
    %558 = vmatpush2.msra.mxu0 0.0
    %559 = vmatprep.subr.mxu0 0.0
    %560 = vmatpush2.msra.mxu0 0.0
    %561 = vmatprep.subr.mxu0 0.0
    %562 = vmatpush2.msra.mxu0 0.0
    %563 = vmatprep.subr.mxu0 0.0
    %564 = vmatpush2.msra.mxu0 0.0
    %565 = vmatprep.subr.mxu0 0.0
    %566 = vmatpush2.msra.mxu0 0.0
    %567 = vmatprep.mubr.f32.mxu0 0.0
    %568 = vmatmul.mubr.f32.gmra.mxu0 %v384
    %v569 = vpop.f32.mrf.mxu0
    %v570 = vadd.f32 %v185, %v569
    %v571 = vpop.f32.mrf.mxu0
    %572 = vmatprep.mubr.f32.mxu0 0.0
    %573 = vmatmul.mubr.f32.gmra.mxu0 %v387
    %v574 = vpop.f32.mrf.mxu0
    %v575 = vadd.f32 %v190, %v574
    %v576 = vpop.f32.mrf.mxu0
    %577 = vmatprep.mubr.f32.mxu0 0.0
    %578 = vmatmul.mubr.f32.gmra.mxu0 %v390
    %v579 = vpop.f32.mrf.mxu0
    %v580 = vadd.f32 %v195, %v579
    %v581 = vpop.f32.mrf.mxu0
    %582 = vmatprep.mubr.f32.mxu0 0.0
    %583 = vmatmul.mubr.f32.gmra.mxu0 %v393
    %v584 = vpop.f32.mrf.mxu0
    %v585 = vadd.f32 %v200, %v584
    %v586 = vpop.f32.mrf.mxu0
    %587 = vmatprep.mubr.f32.mxu0 0.0
    %588 = vmatmul.mubr.f32.gmra.mxu0 %v396
    %v589 = vpop.f32.mrf.mxu0
    %v590 = vadd.f32 %v205, %v589
    %v591 = vpop.f32.mrf.mxu0
    %592 = vmatprep.mubr.f32.mxu0 0.0
    %593 = vmatmul.mubr.f32.gmra.mxu0 %v399
    %v594 = vpop.f32.mrf.mxu0
    %v595 = vadd.f32 %v210, %v594
    %v596 = vpop.f32.mrf.mxu0
    %597 = vmatprep.mubr.f32.mxu0 0.0
    %598 = vmatmul.mubr.f32.gmra.mxu0 %v402
    %v599 = vpop.f32.mrf.mxu0
    %v600 = vadd.f32 %v215, %v599
    %v601 = vpop.f32.mrf.mxu0
    %602 = vmatprep.mubr.f32.mxu0 0.0
    %603 = vmatmul.mubr.f32.gmra.mxu0 %v405
    %v604 = vpop.f32.mrf.mxu0
    %v605 = vadd.f32 %v220, %v604
    %v606 = vpop.f32.mrf.mxu0
    %607 = vmatprep.mubr.f32.mxu0 0.0
    %608 = vmatmul.mubr.f32.gmra.mxu0 %v408
    %v609 = vpop.f32.mrf.mxu0
    %v610 = vadd.f32 %v225, %v609
    %v611 = vpop.f32.mrf.mxu0
    %612 = vmatprep.mubr.f32.mxu0 0.0
    %613 = vmatmul.mubr.f32.gmra.mxu0 %v411
    %v614 = vpop.f32.mrf.mxu0
    %v615 = vadd.f32 %v230, %v614
    %v616 = vpop.f32.mrf.mxu0
    %617 = vmatprep.mubr.f32.mxu0 0.0
    %618 = vmatmul.mubr.f32.gmra.mxu0 %v414
    %v619 = vpop.f32.mrf.mxu0
    %v620 = vadd.f32 %v235, %v619
    %v621 = vpop.f32.mrf.mxu0
    %622 = vmatprep.mubr.f32.mxu0 0.0
    %623 = vmatmul.mubr.f32.gmra.mxu0 %v417
    %v624 = vpop.f32.mrf.mxu0
    %v625 = vadd.f32 %v240, %v624
    %v626 = vpop.f32.mrf.mxu0
    %627 = vmatprep.mubr.f32.mxu0 0.0
    %628 = vmatmul.mubr.f32.gmra.mxu0 %v420
    %v629 = vpop.f32.mrf.mxu0
    %v630 = vadd.f32 %v245, %v629
    %v631 = vpop.f32.mrf.mxu0
    %632 = vmatprep.mubr.f32.mxu0 0.0
    %633 = vmatmul.mubr.f32.gmra.mxu0 %v423
    %v634 = vpop.f32.mrf.mxu0
    %v635 = vadd.f32 %v250, %v634
    %v636 = vpop.f32.mrf.mxu0
    %637 = vmatprep.mubr.f32.mxu0 0.0
    %638 = vmatmul.mubr.f32.gmra.mxu0 %v426
    %v639 = vpop.f32.mrf.mxu0
    %v640 = vadd.f32 %v255, %v639
    %v641 = vpop.f32.mrf.mxu0
    %642 = vmatprep.mubr.f32.mxu0 0.0
    %643 = vmatmul.mubr.f32.gmra.mxu0 %v429
    %v644 = vpop.f32.mrf.mxu0
    %v645 = vadd.f32 %v260, %v644
    %v646 = vpop.f32.mrf.mxu0
    %647 = vmatprep.mubr.f32.mxu0 0.0
    %648 = vmatmul.mubr.f32.gmra.mxu0 %v432
    %v649 = vpop.f32.mrf.mxu0
    %v650 = vadd.f32 %v265, %v649
    %v651 = vpop.f32.mrf.mxu0
    %652 = vmatprep.mubr.f32.mxu0 0.0
    %653 = vmatmul.mubr.f32.gmra.mxu0 %v435
    %v654 = vpop.f32.mrf.mxu0
    %v655 = vadd.f32 %v270, %v654
    %v656 = vpop.f32.mrf.mxu0
    %657 = vmatprep.mubr.f32.mxu0 0.0
    %658 = vmatmul.mubr.f32.gmra.mxu0 %v438
    %v659 = vpop.f32.mrf.mxu0
    %v660 = vadd.f32 %v275, %v659
    %v661 = vpop.f32.mrf.mxu0
    %662 = vmatprep.mubr.f32.mxu0 0.0
    %663 = vmatmul.mubr.f32.gmra.mxu0 %v441
    %v664 = vpop.f32.mrf.mxu0
    %v665 = vadd.f32 %v280, %v664
    %v666 = vpop.f32.mrf.mxu0
    %667 = vmatprep.mubr.f32.mxu0 0.0
    %668 = vmatmul.mubr.f32.gmra.mxu0 %v444
    %v669 = vpop.f32.mrf.mxu0
    %v670 = vadd.f32 %v285, %v669
    %v671 = vpop.f32.mrf.mxu0
    %672 = vmatprep.mubr.f32.mxu0 0.0
    %673 = vmatmul.mubr.f32.gmra.mxu0 %v447
    %v674 = vpop.f32.mrf.mxu0
    %v675 = vadd.f32 %v290, %v674
    %v676 = vpop.f32.mrf.mxu0
    %677 = vmatprep.mubr.f32.mxu0 0.0
    %678 = vmatmul.mubr.f32.gmra.mxu0 %v450
    %v679 = vpop.f32.mrf.mxu0
    %v680 = vadd.f32 %v295, %v679
    %v681 = vpop.f32.mrf.mxu0
    %682 = vmatprep.mubr.f32.mxu0 0.0
    %683 = vmatmul.mubr.f32.gmra.mxu0 %v453
    %v684 = vpop.f32.mrf.mxu0
    %v685 = vadd.f32 %v300, %v684
    %v686 = vpop.f32.mrf.mxu0
    %687 = vmatprep.mubr.f32.mxu0 0.0
    %688 = vmatmul.mubr.f32.gmra.mxu0 %v456
    %v689 = vpop.f32.mrf.mxu0
    %v690 = vadd.f32 %v305, %v689
    %v691 = vpop.f32.mrf.mxu0
    %692 = vmatprep.mubr.f32.mxu0 0.0
    %693 = vmatmul.mubr.f32.gmra.mxu0 %v459
    %v694 = vpop.f32.mrf.mxu0
    %v695 = vadd.f32 %v310, %v694
    %v696 = vpop.f32.mrf.mxu0
    %697 = vmatprep.mubr.f32.mxu0 0.0
    %698 = vmatmul.mubr.f32.gmra.mxu0 %v462
    %v699 = vpop.f32.mrf.mxu0
    %v700 = vadd.f32 %v315, %v699
    %v701 = vpop.f32.mrf.mxu0
    %702 = vmatprep.mubr.f32.mxu0 0.0
    %703 = vmatmul.mubr.f32.gmra.mxu0 %v465
    %v704 = vpop.f32.mrf.mxu0
    %v705 = vadd.f32 %v320, %v704
    %v706 = vpop.f32.mrf.mxu0
    %707 = vmatprep.mubr.f32.mxu0 0.0
    %708 = vmatmul.mubr.f32.gmra.mxu0 %v468
    %v709 = vpop.f32.mrf.mxu0
    %v710 = vadd.f32 %v325, %v709
    %v711 = vpop.f32.mrf.mxu0
    %712 = vmatprep.mubr.f32.mxu0 0.0
    %713 = vmatmul.mubr.f32.gmra.mxu0 %v471
    %v714 = vpop.f32.mrf.mxu0
    %v715 = vadd.f32 %v330, %v714
    %v716 = vpop.f32.mrf.mxu0
    %717 = vmatprep.mubr.f32.mxu0 0.0
    %718 = vmatmul.mubr.f32.gmra.mxu0 %v474
    %v719 = vpop.f32.mrf.mxu0
    %v720 = vadd.f32 %v335, %v719
    %v721 = vpop.f32.mrf.mxu0
    %722 = vmatprep.mubr.f32.mxu0 0.0
    %723 = vmatmul.mubr.f32.gmra.mxu0 %v477
    %v724 = vpop.f32.mrf.mxu0
    %v725 = vadd.f32 %v340, %v724
    %v726 = vpop.f32.mrf.mxu0
    %727 = vmatprep.mubr.f32.mxu0 0.0
    %728 = vmatmul.mubr.f32.gmra.mxu0 %v480
    %v729 = vpop.f32.mrf.mxu0
    %v730 = vadd.f32 %v345, %v729
    %v731 = vpop.f32.mrf.mxu0
    %732 = vmatprep.mubr.f32.mxu0 0.0
    %733 = vmatmul.mubr.f32.gmra.mxu0 %v483
    %v734 = vpop.f32.mrf.mxu0
    %v735 = vadd.f32 %v350, %v734
    %v736 = vpop.f32.mrf.mxu0
    %737 = vmatprep.mubr.f32.mxu0 0.0
    %738 = vmatmul.mubr.f32.gmra.mxu0 %v486
    %v739 = vpop.f32.mrf.mxu0
    %v740 = vadd.f32 %v355, %v739
    %v741 = vpop.f32.mrf.mxu0
    %742 = vmatprep.mubr.f32.mxu0 0.0
    %743 = vmatmul.mubr.f32.gmra.mxu0 %v489
    %v744 = vpop.f32.mrf.mxu0
    %v745 = vadd.f32 %v360, %v744
    %v746 = vpop.f32.mrf.mxu0
    %747 = vmatprep.mubr.f32.mxu0 0.0
    %748 = vmatmul.mubr.f32.gmra.mxu0 %v492
    %v749 = vpop.f32.mrf.mxu0
    %v750 = vadd.f32 %v365, %v749
    %v751 = vpop.f32.mrf.mxu0
    %752 = vmatprep.mubr.f32.mxu0 0.0
    %753 = vmatmul.mubr.f32.gmra.mxu0 %v495
    %v754 = vpop.f32.mrf.mxu0
    %v755 = vadd.f32 %v370, %v754
    %v756 = vpop.f32.mrf.mxu0
    %757 = vmatprep.mubr.f32.mxu0 0.0
    %758 = vmatmul.mubr.f32.gmra.mxu0 %v498
    %v759 = vpop.f32.mrf.mxu0
    %v760 = vadd.f32 %v375, %v759
    %v761 = vpop.f32.mrf.mxu0
    %762 = vmatprep.mubr.f32.mxu0 0.0
    %763 = vmatmul.mubr.f32.gmra.mxu0 %v501
    %v764 = vpop.f32.mrf.mxu0
    %v765 = vadd.f32 %v380, %v764
    %v766 = vpop.f32.mrf.mxu0
    %767 = vdwg.mxu0
    %v768 = vtanh.pop %v570
    %v769 = vtanh.pop %v575
    %v770 = vtanh.pop %v580
    %v771 = vtanh.pop %v585
    %v772 = vtanh.pop %v590
    %v773 = vtanh.pop %v595
    %v774 = vtanh.pop %v600
    %v775 = vtanh.pop %v605
    %v776 = vtanh.pop %v610
    %v777 = vtanh.pop %v615
    %v778 = vtanh.pop %v620
    %v779 = vtanh.pop %v625
    %v780 = vtanh.pop %v630
    %v781 = vtanh.pop %v635
    %v782 = vtanh.pop %v640
    %v783 = vtanh.pop %v645
    %v784 = vtanh.pop %v650
    %v785 = vtanh.pop %v655
    %v786 = vtanh.pop %v660
    %v787 = vtanh.pop %v665
    %v788 = vtanh.pop %v670
    %v789 = vtanh.pop %v675
    %v790 = vtanh.pop %v680
    %v791 = vtanh.pop %v685
    %v792 = vtanh.pop %v690
    %v793 = vtanh.pop %v695
    %v794 = vtanh.pop %v700
    %v795 = vtanh.pop %v705
    %v796 = vtanh.pop %v710
    %v797 = vtanh.pop %v715
    %v798 = vtanh.pop %v720
    %v799 = vtanh.pop %v725
    %v800 = vtanh.pop %v730
    %v801 = vtanh.pop %v735
    %v802 = vtanh.pop %v740
    %v803 = vtanh.pop %v745
    %v804 = vtanh.pop %v750
    %v805 = vtanh.pop %v755
    %v806 = vtanh.pop %v760
    %v807 = vtanh.pop %v765
    %v808 = vld [vmem:[%s5] sm:$0xff]
    %v809 = vld [vmem:[%s5 + $0x8] sm:$0xff]
    %v810 = vld [vmem:[%s5 + $0x10] sm:$0xff]
    %v811 = vld [vmem:[%s5 + $0x18] sm:$0xff]
    %v812 = vld [vmem:[%s5 + $0x20] sm:$0xff]
    %v813 = vld [vmem:[%s5 + $0x28] sm:$0xff]
    %v814 = vld [vmem:[%s5 + $0x30] sm:$0xff]
    %v815 = vld [vmem:[%s5 + $0x38] sm:$0xff]
    %v816 = vld [vmem:[%s5 + $0x40] sm:$0xff]
    %v817 = vld [vmem:[%s5 + $0x48] sm:$0xff]
    %v818 = vld [vmem:[%s5 + $0x50] sm:$0xff]
    %v819 = vld [vmem:[%s5 + $0x58] sm:$0xff]
    %v820 = vld [vmem:[%s6] sm:$0xff]
    %v821 = vld [vmem:[%s6 + $0x8] sm:$0xff]
    %v822 = vld [vmem:[%s6 + $0x10] sm:$0xff]
    %v823 = vld [vmem:[%s6 + $0x18] sm:$0xff]
    %825 = vset.pattern.permute.xlu0 0
    %826 = vperm.xlu0 %825, %v820
    %v827 = vpop.permute.xlu0 %826
    %830 = vset.pattern.permute.xlu0 0
    %831 = vperm.xlu0 %830, %v821
    %v832 = vpop.permute.xlu0 %831
    %835 = vset.pattern.permute.xlu0 0
    %836 = vperm.xlu0 %835, %v822
    %v837 = vpop.permute.xlu0 %836
    %840 = vset.pattern.permute.xlu0 0
    %841 = vperm.xlu0 %840, %v823
    %v842 = vpop.permute.xlu0 %841
    %vm844 = vcmask 523264
    %v846 = vsel %vm844, %v810, 0
    %v849 = vsel %vm844, %v813, 0
    %v852 = vsel %vm844, %v816, 0
    %v855 = vsel %vm844, %v819, 0
    %857 = vmatprep.subr.mxu0 0.0
    %858 = vmatpush1.msra.mxu0 %v783
    %859 = vmatprep.subr.mxu0 0.0
    %860 = vmatpush1.msra.mxu0 %v782
    %861 = vmatprep.subr.mxu0 0.0
    %862 = vmatpush1.msra.mxu0 %v781
    %863 = vmatprep.subr.mxu0 0.0
    %864 = vmatpush1.msra.mxu0 %v780
    %865 = vmatprep.subr.mxu0 0.0
    %866 = vmatpush1.msra.mxu0 %v779
    %867 = vmatprep.subr.mxu0 0.0
    %868 = vmatpush1.msra.mxu0 %v778
    %869 = vmatprep.subr.mxu0 0.0
    %870 = vmatpush1.msra.mxu0 %v777
    %871 = vmatprep.subr.mxu0 0.0
    %872 = vmatpush1.msra.mxu0 %v776
    %873 = vmatprep.subr.mxu0 0.0
    %874 = vmatpush1.msra.mxu0 %v775
    %875 = vmatprep.subr.mxu0 0.0
    %876 = vmatpush1.msra.mxu0 %v774
    %877 = vmatprep.subr.mxu0 0.0
    %878 = vmatpush1.msra.mxu0 %v773
    %879 = vmatprep.subr.mxu0 0.0
    %880 = vmatpush1.msra.mxu0 %v772
    %881 = vmatprep.subr.mxu0 0.0
    %882 = vmatpush1.msra.mxu0 %v771
    %883 = vmatprep.subr.mxu0 0.0
    %884 = vmatpush1.msra.mxu0 %v770
    %885 = vmatprep.subr.mxu0 0.0
    %886 = vmatpush1.msra.mxu0 %v769
    %887 = vmatprep.subr.mxu0 0.0
    %888 = vmatpush1.msra.mxu0 %v768
    %889 = vmatprep.subr.mxu0 0.0
    %890 = vmatpush2.msra.mxu0 %v799
    %891 = vmatprep.subr.mxu0 0.0
    %892 = vmatpush2.msra.mxu0 %v798
    %893 = vmatprep.subr.mxu0 0.0
    %894 = vmatpush2.msra.mxu0 %v797
    %895 = vmatprep.subr.mxu0 0.0
    %896 = vmatpush2.msra.mxu0 %v796
    %897 = vmatprep.subr.mxu0 0.0
    %898 = vmatpush2.msra.mxu0 %v795
    %899 = vmatprep.subr.mxu0 0.0
    %900 = vmatpush2.msra.mxu0 %v794
    %901 = vmatprep.subr.mxu0 0.0
    %902 = vmatpush2.msra.mxu0 %v793
    %903 = vmatprep.subr.mxu0 0.0
    %904 = vmatpush2.msra.mxu0 %v792
    %905 = vmatprep.subr.mxu0 0.0
    %906 = vmatpush2.msra.mxu0 %v791
    %907 = vmatprep.subr.mxu0 0.0
    %908 = vmatpush2.msra.mxu0 %v790
    %909 = vmatprep.subr.mxu0 0.0
    %910 = vmatpush2.msra.mxu0 %v789
    %911 = vmatprep.subr.mxu0 0.0
    %912 = vmatpush2.msra.mxu0 %v788
    %913 = vmatprep.subr.mxu0 0.0
    %914 = vmatpush2.msra.mxu0 %v787
    %915 = vmatprep.subr.mxu0 0.0
    %916 = vmatpush2.msra.mxu0 %v786
    %917 = vmatprep.subr.mxu0 0.0
    %918 = vmatpush2.msra.mxu0 %v785
    %919 = vmatprep.subr.mxu0 0.0
    %920 = vmatpush2.msra.mxu0 %v784
    %921 = vmatprep.mubr.f32.mxu0 %v809
    %922 = vmatmul.mubr.f32.gmra.mxu0 %v808
    %v923 = vpop.f32.mrf.mxu0
    %v924 = vadd.f32 %v827, %v923
    %v925 = vpop.f32.mrf.mxu0
    %926 = vmatprep.mubr.f32.mxu0 %v812
    %927 = vmatmul.mubr.f32.gmra.mxu0 %v811
    %v928 = vpop.f32.mrf.mxu0
    %v929 = vadd.f32 %v832, %v928
    %v930 = vpop.f32.mrf.mxu0
    %931 = vmatprep.mubr.f32.mxu0 %v815
    %932 = vmatmul.mubr.f32.gmra.mxu0 %v814
    %v933 = vpop.f32.mrf.mxu0
    %v934 = vadd.f32 %v837, %v933
    %v935 = vpop.f32.mrf.mxu0
    %936 = vmatprep.mubr.f32.mxu0 %v818
    %937 = vmatmul.mubr.f32.gmra.mxu0 %v817
    %v938 = vpop.f32.mrf.mxu0
    %v939 = vadd.f32 %v842, %v938
    %v940 = vpop.f32.mrf.mxu0
    %941 = vdwg.mxu0
    %942 = vmatprep.subr.mxu0 0.0
    %943 = vmatpush1.msra.mxu0 0.0
    %944 = vmatprep.subr.mxu0 0.0
    %945 = vmatpush1.msra.mxu0 0.0
    %946 = vmatprep.subr.mxu0 0.0
    %947 = vmatpush1.msra.mxu0 0.0
    %948 = vmatprep.subr.mxu0 0.0
    %949 = vmatpush1.msra.mxu0 0.0
    %950 = vmatprep.subr.mxu0 0.0
    %951 = vmatpush1.msra.mxu0 0.0
    %952 = vmatprep.subr.mxu0 0.0
    %953 = vmatpush1.msra.mxu0 0.0
    %954 = vmatprep.subr.mxu0 0.0
    %955 = vmatpush1.msra.mxu0 0.0
    %956 = vmatprep.subr.mxu0 0.0
    %957 = vmatpush1.msra.mxu0 0.0
    %958 = vmatprep.subr.mxu0 0.0
    %959 = vmatpush1.msra.mxu0 %v807
    %960 = vmatprep.subr.mxu0 0.0
    %961 = vmatpush1.msra.mxu0 %v806
    %962 = vmatprep.subr.mxu0 0.0
    %963 = vmatpush1.msra.mxu0 %v805
    %964 = vmatprep.subr.mxu0 0.0
    %965 = vmatpush1.msra.mxu0 %v804
    %966 = vmatprep.subr.mxu0 0.0
    %967 = vmatpush1.msra.mxu0 %v803
    %968 = vmatprep.subr.mxu0 0.0
    %969 = vmatpush1.msra.mxu0 %v802
    %970 = vmatprep.subr.mxu0 0.0
    %971 = vmatpush1.msra.mxu0 %v801
    %972 = vmatprep.subr.mxu0 0.0
    %973 = vmatpush1.msra.mxu0 %v800
    %974 = vmatprep.subr.mxu0 0.0
    %975 = vmatpush2.msra.mxu0 0.0
    %976 = vmatprep.subr.mxu0 0.0
    %977 = vmatpush2.msra.mxu0 0.0
    %978 = vmatprep.subr.mxu0 0.0
    %979 = vmatpush2.msra.mxu0 0.0
    %980 = vmatprep.subr.mxu0 0.0
    %981 = vmatpush2.msra.mxu0 0.0
    %982 = vmatprep.subr.mxu0 0.0
    %983 = vmatpush2.msra.mxu0 0.0
    %984 = vmatprep.subr.mxu0 0.0
    %985 = vmatpush2.msra.mxu0 0.0
    %986 = vmatprep.subr.mxu0 0.0
    %987 = vmatpush2.msra.mxu0 0.0
    %988 = vmatprep.subr.mxu0 0.0
    %989 = vmatpush2.msra.mxu0 0.0
    %990 = vmatprep.subr.mxu0 0.0
    %991 = vmatpush2.msra.mxu0 0.0
    %992 = vmatprep.subr.mxu0 0.0
    %993 = vmatpush2.msra.mxu0 0.0
    %994 = vmatprep.subr.mxu0 0.0
    %995 = vmatpush2.msra.mxu0 0.0
    %996 = vmatprep.subr.mxu0 0.0
    %997 = vmatpush2.msra.mxu0 0.0
    %998 = vmatprep.subr.mxu0 0.0
    %999 = vmatpush2.msra.mxu0 0.0
    %1000 = vmatprep.subr.mxu0 0.0
    %1001 = vmatpush2.msra.mxu0 0.0
    %1002 = vmatprep.subr.mxu0 0.0
    %1003 = vmatpush2.msra.mxu0 0.0
    %1004 = vmatprep.subr.mxu0 0.0
    %1005 = vmatpush2.msra.mxu0 0.0
    %1006 = vmatprep.mubr.f32.mxu0 0.0
    %1007 = vmatmul.mubr.f32.gmra.mxu0 %v846
    %v1008 = vpop.f32.mrf.mxu0
    %v1009 = vadd.f32 %v924, %v1008
    %v1010 = vpop.f32.mrf.mxu0
    %1011 = vmatprep.mubr.f32.mxu0 0.0
    %1012 = vmatmul.mubr.f32.gmra.mxu0 %v849
    %v1013 = vpop.f32.mrf.mxu0
    %v1014 = vadd.f32 %v929, %v1013
    %v1015 = vpop.f32.mrf.mxu0
    %1016 = vmatprep.mubr.f32.mxu0 0.0
    %1017 = vmatmul.mubr.f32.gmra.mxu0 %v852
    %v1018 = vpop.f32.mrf.mxu0
    %v1019 = vadd.f32 %v934, %v1018
    %v1020 = vpop.f32.mrf.mxu0
    %1021 = vmatprep.mubr.f32.mxu0 0.0
    %1022 = vmatmul.mubr.f32.gmra.mxu0 %v855
    %v1023 = vpop.f32.mrf.mxu0
    %v1024 = vadd.f32 %v939, %v1023
    %v1025 = vpop.f32.mrf.mxu0
    %1026 = vdwg.mxu0
    %v1027 = vtanh.pop %v1009
    %v1028 = vtanh.pop %v1014
    %v1029 = vtanh.pop %v1019
    %v1030 = vtanh.pop %v1024
    %v1031 = vld [vmem:[%s7] sm:$0xff]
    %v1032 = vld [vmem:[%s7 + $0x8] sm:$0xff]
    %v1033 = vld [vmem:[%s7 + $0x10] sm:$0xff]
    %v1034 = vld [vmem:[%s7 + $0x18] sm:$0xff]
    %1036 = vset.pattern.permute.xlu0 0
    %1037 = vperm.xlu0 %1036, %v1031
    %v1038 = vpop.permute.xlu0 %1037
    %1041 = vset.pattern.permute.xlu0 0
    %1042 = vperm.xlu0 %1041, %v1032
    %v1043 = vpop.permute.xlu0 %1042
    %1046 = vset.pattern.permute.xlu0 0
    %1047 = vperm.xlu0 %1046, %v1033
    %v1048 = vpop.permute.xlu0 %1047
    %1051 = vset.pattern.permute.xlu0 0
    %1052 = vperm.xlu0 %1051, %v1034
    %v1053 = vpop.permute.xlu0 %1052
    %v1055 = vmul.f32 %v1038, %v1027
    %v1056 = vmul.f32 %v1043, %v1028
    %v1057 = vmul.f32 %v1048, %v1029
    %v1058 = vmul.f32 %v1053, %v1030
    %v1059 = vadd.f32 %v1055, %v1056
    %v1060 = vadd.f32 %v1059, %v1057
    %v1061 = vadd.f32 %v1060, %v1058
    %v1062 = vrot.slane %v1061, 4
    %v1063 = vadd.f32 %v1061, %v1062
    %v1064 = vrot.slane %v1063, 2
    %v1065 = vadd.f32 %v1063, %v1064
    %v1066 = vrot.slane %v1065, 1
    %v1067 = vadd.f32 %v1065, %v1066
    %v1068 = vld [vmem:[#allocation2] sm:$0x1]
    %1070 = vset.pattern.permute.xlu0 0
    %1071 = vperm.xlu0 %1070, %v1068
    %v1072 = vpop.permute.xlu0 %1071
    %v1074 = vlaneseq
    %v1075 = vshrl.u32 %v1074, 7
    %v1076 = vsub.s32 0, %v1075
    %v1077 = vrot.slane %v1072, %v1076
    %v1078 = vadd.f32 %v1067, %v1077
    %1079 = vst [vmem:[#allocation3] sm:$0x1] %v1078
    // Predicated region
    $region38: #{tpu_custom_call.1} parent=1 // pred_check
      _
    $region39: #{tpu_custom_call.1} parent=1 // pred_check_branch
      %1081 = sbr.rel (0) target = $region41
    $region40: #{tpu_custom_call.1} parent=1 // pred_region
      %s1083 = ssub.s32 16, 16
      %1084 = vsyncadd [#allocation4], %s1083
      %s1086 = sshll.u32 [#allocation3], 4
      %s1087 = int_to_ptr.vmem [resolvable:$true] %s1086
      %1089 = dma.vmem_to_hbm [thread:$0]  %s1087, 16, %s9, [#allocation4]
    $region41: #{tpu_custom_call.1} parent=1 // pred_fallthru
      _
    // Predicated region
    $region42: #{tpu_custom_call.1} parent=1 // pred_check
      _
    $region43: #{tpu_custom_call.1} parent=1 // pred_check_branch
      %1091 = sbr.rel (0) target = $region45
    $region44: #{tpu_custom_call.1} parent=1 // pred_region
      %1092 = dma.done [#allocation4], 16
    $region45: #{tpu_custom_call.1} parent=1 // pred_fallthru
      _
    %1093 = vsyncpa [#allocation4], 1

</llo_original>
